<compile_context>
chip_gen: v7x
topology: tpu7x:2x2x1
jax: 0.10.0
libtpu: 0.0.40
codegen_flags: <defaults>
</compile_context>

<pallas_src>
import jax
import jax.numpy as jnp
from jax.experimental import pallas as pl
from jax.experimental.pallas import tpu as pltpu


def _intent_decoder_kernel(enc_ref, q_ref, d_ref,
                           w_attn_ref, w_out_ref, b_ref,
                           out_ref):
    """Attention over encoder outputs + fused linear intent head.

    enc_ref    : (TB, T, E)     encoder outputs (inputIntent), streamed per step
    q_ref      : (TB, H)        intent decoder hidden state (attention query)
    d_ref      : (TB, H)        domain decoder hidden state
    w_attn_ref : (H, E)         bilinear attention projection        (resident)
    w_out_ref  : (E+2H, I_pad)  fused [w_ctx; w_int; w_dom] weight   (resident)
    b_ref      : (1, I_pad)     bias (lane-padded)                   (resident)
    out_ref    : (TB, I_pad)    intent logits (lane-dense)
    """
    enc = enc_ref[...].astype(jnp.float32)          # (TB, T, E)
    q = q_ref[...].astype(jnp.float32)              # (TB, H)
    d = d_ref[...].astype(jnp.float32)              # (TB, H)

    # Attention query projection (MXU).
    qp = jnp.dot(q, w_attn_ref[...].astype(jnp.float32),
                 preferred_element_type=jnp.float32)               # (TB, E)

    # Bilinear scores on the MXU: s[b, 0, t] = qp[b, :] . enc[b, t, :]
    scores = jnp.einsum("bqe,bte->bqt", qp[:, None, :], enc,
                        preferred_element_type=jnp.float32)        # (TB, 1, T)

    # Numerically stable softmax over T (f32; exp + approx-reciprocal on EUP).
    scores = scores - jnp.max(scores, axis=-1, keepdims=True)
    p = jnp.exp(scores)
    alpha = p * pl.reciprocal(jnp.sum(p, axis=-1, keepdims=True), approx=True)

    # Context read on the MXU: ctx[b, :] = sum_t alpha[b, t] * enc[b, t, :]
    ctx = jnp.einsum("bqt,bte->bqe", alpha, enc,
                     preferred_element_type=jnp.float32)[:, 0, :]  # (TB, E)

    # Single fused output matmul: [ctx ; q ; d] @ W_out + b.
    act = jnp.concatenate([ctx, q, d], axis=-1)                    # (TB, E+2H)
    logits = jnp.dot(act, w_out_ref[...].astype(jnp.float32),
                     preferred_element_type=jnp.float32) + b_ref[...]
    out_ref[...] = logits.astype(out_ref.dtype)


def seq2intent_forward(inputIntent, intent_d, domain_d, params, *, block_b=None):
    """Pallas implementation of Seq2Intent.forward.

    Returns (intent_logits, intent_d) — intent_d is passed through unchanged,
    exactly as in the PyTorch module.
    """
    B, T, E = inputIntent.shape
    H = intent_d.shape[1]
    I = params["w_ctx"].shape[1]
    I_pad = ((I + 127) // 128) * 128          # lane-dense output / weight N
    K = E + 2 * H

    # Host-side weight fusion + lane padding (one-time XLA ops).
    w_out = jnp.concatenate([params["w_ctx"], params["w_int"], params["w_dom"]],
                            axis=0)                                   # (K, I)
    w_out = jnp.pad(w_out, ((0, 0), (0, I_pad - I)))                  # (K, I_pad)
    bias = jnp.pad(params["bias"], ((0, 0), (0, I_pad - I)))          # (1, I_pad)
    w_attn = params["w_attn"]                                         # (H, E)

    # Batch tile: keep the second-minor dim 8-aligned unless B itself is small.
    if block_b is None:
        block_b = min(B, 128) if (B % 8 == 0) else B
    grid = (pl.cdiv(B, block_b),)

    flops = 2 * B * H * E + 4 * B * T * E + 2 * B * K * I_pad
    bytes_accessed = 4 * (B * T * E + 2 * B * H + H * E + K * I_pad
                          + I_pad + B * I_pad)
    cost = pl.CostEstimate(flops=flops,
                           transcendentals=B * (T + 1),
                           bytes_accessed=bytes_accessed)

    out = pl.pallas_call(
        _intent_decoder_kernel,
        out_shape=jax.ShapeDtypeStruct((B, I_pad), jnp.float32),
        grid_spec=pltpu.PrefetchScalarGridSpec(
            num_scalar_prefetch=0,
            grid=grid,
            in_specs=[
                # enc streams per grid step (double-buffered by Pallas).
                pl.BlockSpec((block_b, T, E), lambda i: (i, 0, 0)),
                pl.BlockSpec((block_b, H), lambda i: (i, 0)),
                pl.BlockSpec((block_b, H), lambda i: (i, 0)),
                # Weights / bias: constant index_map -> resident in VMEM.
                pl.BlockSpec((H, E), lambda i: (0, 0)),
                pl.BlockSpec((K, I_pad), lambda i: (0, 0)),
                pl.BlockSpec((1, I_pad), lambda i: (0, 0)),
            ],
            out_specs=pl.BlockSpec((block_b, I_pad), lambda i: (i, 0)),
        ),
        compiler_params=pltpu.CompilerParams(
            dimension_semantics=("parallel",)),
        cost_estimate=cost,
    )(inputIntent, intent_d, domain_d, w_attn, w_out, bias)

    return out[:, :I], intent_d


def init_params(key, enc_hid, intent_hid, n_intents):
    ks = jax.random.split(key, 6)
    scale = 0.1
    params = {
        "w_attn": scale * jax.random.normal(ks[0], (intent_hid, enc_hid), jnp.float32),
        "w_ctx":  scale * jax.random.normal(ks[1], (enc_hid, n_intents), jnp.float32),
        "w_int":  scale * jax.random.normal(ks[2], (intent_hid, n_intents), jnp.float32),
        "w_dom":  scale * jax.random.normal(ks[3], (intent_hid, n_intents), jnp.float32),
        "bias":   scale * jax.random.normal(ks[4], (1, n_intents), jnp.float32),
        # self.fn = nn.Linear(EncoderHidSize, IntentHidSize): declared in
        # __init__ but unused in forward(); created here for parity, not applied.
        "fn_w":   scale * jax.random.normal(ks[5], (enc_hid, intent_hid), jnp.float32),
        "fn_b":   jnp.zeros((intent_hid,), jnp.float32),
    }
    return params


if __name__ == "__main__":
    B, T = 2, 8                 # batch, sequence length
    ENC_HID = 32                # EncoderHidSize
    INT_HID = 32                # IntentHidSize / decoder hidden
    N_INTENTS = 16

    key = jax.random.PRNGKey(0)
    k_in, k_int, k_dom, k_par = jax.random.split(key, 4)

    inputIntent = jax.random.normal(k_in, (B, T, ENC_HID), jnp.float32)
    intent_d = jax.random.normal(k_int, (B, INT_HID), jnp.float32)
    domain_d = jax.random.normal(k_dom, (B, INT_HID), jnp.float32)

    params = init_params(k_par, ENC_HID, INT_HID, N_INTENTS)

    intent, intent_d_out = seq2intent_forward(inputIntent, intent_d, domain_d, params)
    jax.block_until_ready((intent, intent_d_out))

    # Pure-JAX reference check of the kernel's decoder math.
    qp = intent_d @ params["w_attn"]
    scores = jnp.einsum("be,bte->bt", qp, inputIntent)
    alpha = jax.nn.softmax(scores, axis=-1)
    ctx = jnp.einsum("bt,bte->be", alpha, inputIntent)
    ref = (ctx @ params["w_ctx"] + intent_d @ params["w_int"]
           + domain_d @ params["w_dom"] + params["bias"])
    assert intent.shape == (B, N_INTENTS)
    # approx=True softmax reciprocal -> slightly looser (but still tight) check.
    assert jnp.allclose(intent, ref, atol=1e-3, rtol=1e-3)
    assert jnp.array_equal(intent_d_out, intent_d)

    print("KERNEL_OK")
</pallas_src>

<mosaic_0001>
module attributes {stable_mosaic.version = 11 : i64} {
  func.func @_intent_decoder_kernel(%arg0: i32, %arg1: memref<2x8x32xf32, #tpu.memory_space<vmem>>, %arg2: memref<2x32xf32, #tpu.memory_space<vmem>>, %arg3: memref<2x32xf32, #tpu.memory_space<vmem>>, %arg4: memref<32x32xf32, #tpu.memory_space<vmem>>, %arg5: memref<96x128xf32, #tpu.memory_space<vmem>>, %arg6: memref<1x128xf32, #tpu.memory_space<vmem>>, %arg7: memref<2x128xf32, #tpu.memory_space<vmem>>) attributes {dimension_semantics = [#tpu.dimension_semantics<parallel>], iteration_bounds = array<i64: 1>, scalar_prefetch = 0 : i64, scratch_operands = 0 : i64, tpu.core_type = #tpu.core_type<tc>, window_params = [{transform_indices = @transform_0, window_bounds = array<i64: 2, 8, 32>}, {transform_indices = @transform_1, window_bounds = array<i64: 2, 32>}, {transform_indices = @transform_2, window_bounds = array<i64: 2, 32>}, {pipeline_mode = #tpu.pipeline_mode<synchronous>, transform_indices = @transform_3, window_bounds = array<i64: 32, 32>}, {pipeline_mode = #tpu.pipeline_mode<synchronous>, transform_indices = @transform_4, window_bounds = array<i64: 96, 128>}, {pipeline_mode = #tpu.pipeline_mode<synchronous>, transform_indices = @transform_5, window_bounds = array<i64: 1, 128>}, {transform_indices = @transform_6, window_bounds = array<i64: 2, 128>}]} {
    %c0 = arith.constant 0 : index
    %c0_0 = arith.constant 0 : index
    %c0_1 = arith.constant 0 : index
    %0 = vector.load %arg1[%c0, %c0_0, %c0_1] : memref<2x8x32xf32, #tpu.memory_space<vmem>>, vector<2x8x32xf32>
    %c0_2 = arith.constant 0 : index
    %c0_3 = arith.constant 0 : index
    %1 = vector.load %arg2[%c0_2, %c0_3] : memref<2x32xf32, #tpu.memory_space<vmem>>, vector<2x32xf32>
    %c0_4 = arith.constant 0 : index
    %c0_5 = arith.constant 0 : index
    %2 = vector.load %arg3[%c0_4, %c0_5] : memref<2x32xf32, #tpu.memory_space<vmem>>, vector<2x32xf32>
    %c0_6 = arith.constant 0 : index
    %c0_7 = arith.constant 0 : index
    %3 = vector.load %arg4[%c0_6, %c0_7] : memref<32x32xf32, #tpu.memory_space<vmem>>, vector<32x32xf32>
    %cst = arith.constant dense<0.000000e+00> : vector<2x32xf32>
    %4 = tpu.matmul %1, %3, %cst {dimension_numbers = #tpu.dot_dimension_numbers<[1], [0], [0], [1], [0, 0, 1, 1], [], []>} : vector<2x32xf32>, vector<32x32xf32>, vector<2x32xf32> -> vector<2x32xf32>
    %5 = vector.shape_cast %4 : vector<2x32xf32> to vector<2x1x32xf32>
    "tpu.trace_start"() <{level = 10 : i32, message = "bqe,bte->bqt"}> : () -> ()
    %cst_8 = arith.constant dense<0.000000e+00> : vector<2x1x8xf32>
    %6 = tpu.matmul %5, %0, %cst_8 {dimension_numbers = #tpu.dot_dimension_numbers<[2], [2], [1], [1], [0, 0, 0, 1, 1, 1], [0], [0]>} : vector<2x1x32xf32>, vector<2x8x32xf32>, vector<2x1x8xf32> -> vector<2x1x8xf32>
    "tpu.trace_stop"() : () -> ()
    %cst_9 = arith.constant dense<0xFF800000> : vector<2x1xf32>
    %7 = vector.multi_reduction <maximumf>, %6, %cst_9 [2] : vector<2x1x8xf32> to vector<2x1xf32>
    %8 = vector.shape_cast %7 : vector<2x1xf32> to vector<2x1x1xf32>
    %9 = vector.broadcast %8 : vector<2x1x1xf32> to vector<2x1x8xf32>
    %10 = arith.subf %6, %9 : vector<2x1x8xf32>
    %11 = math.exp %10 : vector<2x1x8xf32>
    %cst_10 = arith.constant dense<0.000000e+00> : vector<2x1xf32>
    %12 = vector.multi_reduction <add>, %11, %cst_10 [2] : vector<2x1x8xf32> to vector<2x1xf32>
    %13 = vector.shape_cast %12 : vector<2x1xf32> to vector<2x1x1xf32>
    %14 = tpu.reciprocal %13 {approx = true} : vector<2x1x1xf32> -> vector<2x1x1xf32>
    %15 = vector.broadcast %14 : vector<2x1x1xf32> to vector<2x1x8xf32>
    %16 = arith.mulf %11, %15 : vector<2x1x8xf32>
    "tpu.trace_start"() <{level = 10 : i32, message = "bqt,bte->bqe"}> : () -> ()
    %cst_11 = arith.constant dense<0.000000e+00> : vector<2x1x32xf32>
    %17 = tpu.matmul %16, %0, %cst_11 {dimension_numbers = #tpu.dot_dimension_numbers<[2], [1], [1], [2], [0, 0, 0, 1, 1, 2], [0], [0]>} : vector<2x1x8xf32>, vector<2x8x32xf32>, vector<2x1x32xf32> -> vector<2x1x32xf32>
    "tpu.trace_stop"() : () -> ()
    %18 = vector.shape_cast %17 : vector<2x1x32xf32> to vector<2x32xf32>
    %19 = tpu.concatenate %18, %1, %2 in 1 : vector<2x32xf32>, vector<2x32xf32>, vector<2x32xf32> -> vector<2x96xf32>
    %c0_12 = arith.constant 0 : index
    %c0_13 = arith.constant 0 : index
    %20 = vector.load %arg5[%c0_12, %c0_13] : memref<96x128xf32, #tpu.memory_space<vmem>>, vector<96x128xf32>
    %cst_14 = arith.constant dense<0.000000e+00> : vector<2x128xf32>
    %21 = tpu.matmul %19, %20, %cst_14 {dimension_numbers = #tpu.dot_dimension_numbers<[1], [0], [0], [1], [0, 0, 1, 1], [], []>} : vector<2x96xf32>, vector<96x128xf32>, vector<2x128xf32> -> vector<2x128xf32>
    %c0_15 = arith.constant 0 : index
    %c0_16 = arith.constant 0 : index
    %22 = vector.load %arg6[%c0_15, %c0_16] : memref<1x128xf32, #tpu.memory_space<vmem>>, vector<1x128xf32>
    %23 = vector.broadcast %22 : vector<1x128xf32> to vector<2x128xf32>
    %24 = arith.addf %21, %23 : vector<2x128xf32>
    %c0_17 = arith.constant 0 : index
    %c0_18 = arith.constant 0 : index
    %25 = vector.load %arg7[%c0_17, %c0_18] : memref<2x128xf32, #tpu.memory_space<vmem>>, vector<2x128xf32>
    tpu.vector_store %arg7[%c0_17, %c0_18], %24 {strides = array<i32>} : memref<2x128xf32, #tpu.memory_space<vmem>>, vector<2x128xf32>,
    return
  }
  func.func @transform_0(%arg0: i32) -> (i32, i32, i32) {
    %c0_i32 = arith.constant 0 : i32
    %c0_i32_0 = arith.constant 0 : i32
    %c0_i32_1 = arith.constant 0 : i32
    return %arg0, %c0_i32, %c0_i32_0 : i32, i32, i32
  }
  func.func @transform_1(%arg0: i32) -> (i32, i32) {
    %c0_i32 = arith.constant 0 : i32
    %c0_i32_0 = arith.constant 0 : i32
    return %arg0, %c0_i32 : i32, i32
  }
  func.func @transform_2(%arg0: i32) -> (i32, i32) {
    %c0_i32 = arith.constant 0 : i32
    %c0_i32_0 = arith.constant 0 : i32
    return %arg0, %c0_i32 : i32, i32
  }
  func.func @transform_3(%arg0: i32) -> (i32, i32) {
    %c0_i32 = arith.constant 0 : i32
    %c0_i32_0 = arith.constant 0 : i32
    %c0_i32_1 = arith.constant 0 : i32
    return %c0_i32, %c0_i32_0 : i32, i32
  }
  func.func @transform_4(%arg0: i32) -> (i32, i32) {
    %c0_i32 = arith.constant 0 : i32
    %c0_i32_0 = arith.constant 0 : i32
    %c0_i32_1 = arith.constant 0 : i32
    return %c0_i32, %c0_i32_0 : i32, i32
  }
  func.func @transform_5(%arg0: i32) -> (i32, i32) {
    %c0_i32 = arith.constant 0 : i32
    %c0_i32_0 = arith.constant 0 : i32
    %c0_i32_1 = arith.constant 0 : i32
    return %c0_i32, %c0_i32_0 : i32, i32
  }
  func.func @transform_6(%arg0: i32) -> (i32, i32) {
    %c0_i32 = arith.constant 0 : i32
    %c0_i32_0 = arith.constant 0 : i32
    return %arg0, %c0_i32 : i32, i32
  }
}

</mosaic_0001>

<llo_original>
// kernel: tpu_custom_call.1
$region0: #{tpu_custom_call.1}
  #allocation0 [shape = 'u32[]', space=smem, size = 0x4, offset = 0x4, fixed_abs, tag = 'smem constant byte address 0x4 - core index']
  #allocation1 [shape = 'u32[144,128]{1,0:T(1,128)}', space=vmem, size = 0x12000, scoped, tag = 'internal scratch']
  %s0 = inlined_call_operand.hbm [shape: f32[2,8,32], index: 0, kind: input, shape index: {}]
  %s1 = inlined_call_operand.vmem [shape: f32[2,32], index: 1, kind: input, shape index: {}]
  %s2 = inlined_call_operand.vmem [shape: f32[2,32], index: 2, kind: input, shape index: {}]
  %s3 = inlined_call_operand.hbm [shape: f32[32,32], index: 3, kind: input, shape index: {}]
  %s4 = inlined_call_operand.hbm [shape: f32[96,128], index: 4, kind: input, shape index: {}]
  %s5 = inlined_call_operand.vmem [shape: f32[1,128], index: 5, kind: input, shape index: {}]
  %s6 = inlined_call_operand.hbm [shape: f32[2,128], index: 6, kind: output, shape index: {}]
  %s7 = sld [smem:[#allocation0]]
  $region46: #{tpu_custom_call.1} parent=0
    _
  %s9 = ssub.s32 1, %s7
  %s10 = scalar_select 0, %s9, %s7
  $region1: #{tpu_custom_call.1} parent=0
    #allocation2 [shape = 'u8[8192]{0}', space=vmem, size = 0x2000, scoped, tag = 'input window, operand 0, single buffered']
    #allocation3 [shape = 's32[1]{0}', space=sflag, size = 0x4, scoped, tag = 'scoped memory for tpu_custom_call.1']
    #allocation4 [shape = 's32[1]{0}', space=sflag, size = 0x4, scoped, tag = 'scoped memory for tpu_custom_call.1']
    #allocation5 [shape = 'u8[16384]{0}', space=vmem, size = 0x4000, scoped, tag = 'input window, operand 3, single buffered']
    #allocation6 [shape = 's32[1]{0}', space=sflag, size = 0x4, scoped, tag = 'scoped memory for tpu_custom_call.1']
    #allocation7 [shape = 'u8[49152]{0}', space=vmem, size = 0xc000, scoped, tag = 'input window, operand 4, single buffered']
    #allocation8 [shape = 'u8[1024]{0}', space=vmem, size = 0x400, scoped, tag = 'output window, operand 0, single buffered']
    %11 = vsyncpa [#allocation3], 0
    %12 = vsyncpa [#allocation6], 0
    %13 = vsyncpa [#allocation4], 0
    // Predicated region
    $region2: #{tpu_custom_call.1} parent=1 // pred_check
      _
    $region3: #{tpu_custom_call.1} parent=1 // pred_check_branch
      %15 = sbr.rel (0) target = $region5
    $region4: #{tpu_custom_call.1} parent=1 // pred_region
      %s17 = ssub.s32 256, 256
      %18 = vsyncadd [#allocation3], %s17
      %s19 = sshll.u32 [#allocation2], 4
      %s20 = int_to_ptr.vmem [resolvable:$true] %s19
      %25 = dma.hbm_to_vmem [thread:$0]  %s0, 256, %s20, [#allocation3], 128, 128, 8
    $region5: #{tpu_custom_call.1} parent=1 // pred_fallthru
      _
    // Predicated region
    $region6: #{tpu_custom_call.1} parent=1 // pred_check
      _
    $region7: #{tpu_custom_call.1} parent=1 // pred_check_branch
      %27 = sbr.rel (0) target = $region9
    $region8: #{tpu_custom_call.1} parent=1 // pred_region
      _
    $region9: #{tpu_custom_call.1} parent=1 // pred_fallthru
      _
    // Predicated region
    $region10: #{tpu_custom_call.1} parent=1 // pred_check
      _
    $region11: #{tpu_custom_call.1} parent=1 // pred_check_branch
      %29 = sbr.rel (0) target = $region13
    $region12: #{tpu_custom_call.1} parent=1 // pred_region
      _
    $region13: #{tpu_custom_call.1} parent=1 // pred_fallthru
      _
    // Predicated region
    $region14: #{tpu_custom_call.1} parent=1 // pred_check
      _
    $region15: #{tpu_custom_call.1} parent=1 // pred_check_branch
      %31 = sbr.rel (0) target = $region17
    $region16: #{tpu_custom_call.1} parent=1 // pred_region
      %s33 = ssub.s32 512, 512
      %34 = vsyncadd [#allocation6], %s33
      %s35 = sshll.u32 [#allocation5], 4
      %s36 = int_to_ptr.vmem [resolvable:$true] %s35
      %41 = dma.hbm_to_vmem [thread:$0]  %s3, 512, %s36, [#allocation6], 128, 128, 8
    $region17: #{tpu_custom_call.1} parent=1 // pred_fallthru
      _
    // Predicated region
    $region18: #{tpu_custom_call.1} parent=1 // pred_check
      _
    $region19: #{tpu_custom_call.1} parent=1 // pred_check_branch
      %43 = sbr.rel (0) target = $region21
    $region20: #{tpu_custom_call.1} parent=1 // pred_region
      %s45 = ssub.s32 1536, 1536
      %46 = vsyncadd [#allocation6], %s45
      %s47 = sshll.u32 [#allocation7], 4
      %s48 = int_to_ptr.vmem [resolvable:$true] %s47
      %53 = dma.hbm_to_vmem [thread:$0]  %s4, 1536, %s48, [#allocation6], 128, 128, 8
    $region21: #{tpu_custom_call.1} parent=1 // pred_fallthru
      _
    // Predicated region
    $region22: #{tpu_custom_call.1} parent=1 // pred_check
      _
    $region23: #{tpu_custom_call.1} parent=1 // pred_check_branch
      %55 = sbr.rel (0) target = $region25
    $region24: #{tpu_custom_call.1} parent=1 // pred_region
      _
    $region25: #{tpu_custom_call.1} parent=1 // pred_fallthru
      _
    // Predicated region
    $region26: #{tpu_custom_call.1} parent=1 // pred_check
      _
    $region27: #{tpu_custom_call.1} parent=1 // pred_check_branch
      %57 = sbr.rel (0) target = $region29
    $region28: #{tpu_custom_call.1} parent=1 // pred_region
      %58 = dma.done [#allocation3], 256
    $region29: #{tpu_custom_call.1} parent=1 // pred_fallthru
      _
    // Predicated region
    $region30: #{tpu_custom_call.1} parent=1 // pred_check
      _
    $region31: #{tpu_custom_call.1} parent=1 // pred_check_branch
      %60 = sbr.rel (0) target = $region33
    $region32: #{tpu_custom_call.1} parent=1 // pred_region
      %61 = dma.done [#allocation6], 512
    $region33: #{tpu_custom_call.1} parent=1 // pred_fallthru
      _
    // Predicated region
    $region34: #{tpu_custom_call.1} parent=1 // pred_check
      _
    $region35: #{tpu_custom_call.1} parent=1 // pred_check_branch
      %63 = sbr.rel (0) target = $region37
    $region36: #{tpu_custom_call.1} parent=1 // pred_region
      %64 = dma.done [#allocation6], 1536
    $region37: #{tpu_custom_call.1} parent=1 // pred_fallthru
      _
    %v65 = vld [vmem:[#allocation2] sm:$0xff]
    %v66 = vld [vmem:[#allocation2 + $0x8] sm:$0xff]
    %v67 = vld [vmem:[%s1] sm:$0x3]
    %v68 = vld [vmem:[%s2] sm:$0x3]
    %v69 = vld [vmem:[#allocation5] sm:$0xff]
    %v70 = vld [vmem:[#allocation5 + $0x8] sm:$0xff]
    %v71 = vld [vmem:[#allocation5 + $0x10] sm:$0xff]
    %v72 = vld [vmem:[#allocation5 + $0x18] sm:$0xff]
    %vm73 = vcmask 261120
    %v75 = vsel %vm73, %v67, 0
    %77 = vmatprep.subr.mxu0 0.0
    %78 = vmatpush1.msra.mxu0 %v69
    %79 = vmatprep.subr.mxu0 0.0
    %80 = vmatpush1.msra.mxu0 %v70
    %81 = vmatprep.subr.mxu0 0.0
    %82 = vmatpush1.msra.mxu0 %v71
    %83 = vmatprep.subr.mxu0 0.0
    %84 = vmatpush1.msra.mxu0 %v72
    %85 = vmatprep.subr.mxu0 0.0
    %86 = vmatpush1.msra.mxu0 0.0
    %87 = vmatprep.subr.mxu0 0.0
    %88 = vmatpush1.msra.mxu0 0.0
    %89 = vmatprep.subr.mxu0 0.0
    %90 = vmatpush1.msra.mxu0 0.0
    %91 = vmatprep.subr.mxu0 0.0
    %92 = vmatpush1.msra.mxu0 0.0
    %93 = vmatprep.subr.mxu0 0.0
    %94 = vmatpush1.msra.mxu0 0.0
    %95 = vmatprep.subr.mxu0 0.0
    %96 = vmatpush1.msra.mxu0 0.0
    %97 = vmatprep.subr.mxu0 0.0
    %98 = vmatpush1.msra.mxu0 0.0
    %99 = vmatprep.subr.mxu0 0.0
    %100 = vmatpush1.msra.mxu0 0.0
    %101 = vmatprep.subr.mxu0 0.0
    %102 = vmatpush1.msra.mxu0 0.0
    %103 = vmatprep.subr.mxu0 0.0
    %104 = vmatpush1.msra.mxu0 0.0
    %105 = vmatprep.subr.mxu0 0.0
    %106 = vmatpush1.msra.mxu0 0.0
    %107 = vmatprep.subr.mxu0 0.0
    %108 = vmatpush1.msra.mxu0 0.0
    %109 = vmatprep.subr.mxu0 0.0
    %110 = vmatpush1.msra.mxu0 0.0
    %111 = vmatprep.subr.mxu0 0.0
    %112 = vmatpush1.msra.mxu0 0.0
    %113 = vmatprep.subr.mxu0 0.0
    %114 = vmatpush1.msra.mxu0 0.0
    %115 = vmatprep.subr.mxu0 0.0
    %116 = vmatpush1.msra.mxu0 0.0
    %117 = vmatprep.subr.mxu0 0.0
    %118 = vmatpush1.msra.mxu0 0.0
    %119 = vmatprep.subr.mxu0 0.0
    %120 = vmatpush1.msra.mxu0 0.0
    %121 = vmatprep.subr.mxu0 0.0
    %122 = vmatpush1.msra.mxu0 0.0
    %123 = vmatprep.subr.mxu0 0.0
    %124 = vmatpush1.msra.mxu0 0.0
    %125 = vmatprep.subr.mxu0 0.0
    %126 = vmatpush1.msra.mxu0 0.0
    %127 = vmatprep.subr.mxu0 0.0
    %128 = vmatpush1.msra.mxu0 0.0
    %129 = vmatprep.subr.mxu0 0.0
    %130 = vmatpush1.msra.mxu0 0.0
    %131 = vmatprep.subr.mxu0 0.0
    %132 = vmatpush1.msra.mxu0 0.0
    %133 = vmatprep.subr.mxu0 0.0
    %134 = vmatpush1.msra.mxu0 0.0
    %135 = vmatprep.subr.mxu0 0.0
    %136 = vmatpush1.msra.mxu0 0.0
    %137 = vmatprep.subr.mxu0 0.0
    %138 = vmatpush1.msra.mxu0 0.0
    %139 = vmatprep.subr.mxu0 0.0
    %140 = vmatpush1.msra.mxu0 0.0
    %141 = vmatprep.mubr.f32.mxu0 0.0
    %142 = vmatmul.mubr.f32.gmra.mrb[0].mxu0 %v75
    %v143 = vpop.f32.mrb[0].mxu0
    %v144 = vadd.f32 0.0, %v143
    %v145 = vpop.f32.mrb[0].mxu0
    %146 = vdwg.mxu0
    %v149 = vunpack.c.l.s4 1966171168
    %v150 = vunpack.c.0.s8 %v149
    %v151 = vlaneseq
    %v152 = vshrl.u32 %v151, 7
    %v153 = vsub.s32 %v150, %v152
    %v154 = vrot.slane %v144, %v153
    %v155 = vcombine.high %v154, %v154
    %v157 = vunpack.c.l.s4 1966171168
    %v158 = vunpack.c.0.s8 %v157
    %v159 = vlaneseq
    %v160 = vshrl.u32 %v159, 7
    %v161 = vsub.s32 %v158, %v160
    %v162 = vrot.slane %v154, %v161
    %v164 = vunpack.c.l.s4 1966171168
    %v165 = vunpack.c.0.s8 %v164
    %v166 = vlaneseq
    %v167 = vshrl.u32 %v166, 7
    %v168 = vsub.s32 %v165, %v167
    %v169 = vrot.slane %v155, %v168
    %v170 = vsel %vm73, %v162, 0
    %v173 = vsel %vm73, %v65, 0
    %175 = vmatprep.subr.mxu0 0.0
    %176 = vmatpush1.xpose.msra.mxu0 %v173
    %177 = vmatprep.subr.mxu0 0.0
    %178 = vmatpush1.xpose.msra.mxu0 0.0
    %179 = vmatprep.subr.mxu0 0.0
    %180 = vmatpush1.xpose.msra.mxu0 0.0
    %181 = vmatprep.subr.mxu0 0.0
    %182 = vmatpush1.xpose.msra.mxu0 0.0
    %183 = vmatprep.subr.mxu0 0.0
    %184 = vmatpush1.xpose.msra.mxu0 0.0
    %185 = vmatprep.subr.mxu0 0.0
    %186 = vmatpush1.xpose.msra.mxu0 0.0
    %187 = vmatprep.subr.mxu0 0.0
    %188 = vmatpush1.xpose.msra.mxu0 0.0
    %189 = vmatprep.subr.mxu0 0.0
    %190 = vmatpush1.xpose.msra.mxu0 0.0
    %191 = vmatprep.subr.mxu0 0.0
    %192 = vmatpush1.xpose.msra.mxu0 0.0
    %193 = vmatprep.subr.mxu0 0.0
    %194 = vmatpush1.xpose.msra.mxu0 0.0
    %195 = vmatprep.subr.mxu0 0.0
    %196 = vmatpush1.xpose.msra.mxu0 0.0
    %197 = vmatprep.subr.mxu0 0.0
    %198 = vmatpush1.xpose.msra.mxu0 0.0
    %199 = vmatprep.subr.mxu0 0.0
    %200 = vmatpush1.xpose.msra.mxu0 0.0
    %201 = vmatprep.subr.mxu0 0.0
    %202 = vmatpush1.xpose.msra.mxu0 0.0
    %203 = vmatprep.subr.mxu0 0.0
    %204 = vmatpush1.xpose.msra.mxu0 0.0
    %205 = vmatprep.subr.mxu0 0.0
    %206 = vmatpush1.xpose.msra.mxu0 0.0
    %207 = vmatprep.subr.mxu0 0.0
    %208 = vmatpush1.xpose.msra.mxu0 0.0
    %209 = vmatprep.subr.mxu0 0.0
    %210 = vmatpush1.xpose.msra.mxu0 0.0
    %211 = vmatprep.subr.mxu0 0.0
    %212 = vmatpush1.xpose.msra.mxu0 0.0
    %213 = vmatprep.subr.mxu0 0.0
    %214 = vmatpush1.xpose.msra.mxu0 0.0
    %215 = vmatprep.subr.mxu0 0.0
    %216 = vmatpush1.xpose.msra.mxu0 0.0
    %217 = vmatprep.subr.mxu0 0.0
    %218 = vmatpush1.xpose.msra.mxu0 0.0
    %219 = vmatprep.subr.mxu0 0.0
    %220 = vmatpush1.xpose.msra.mxu0 0.0
    %221 = vmatprep.subr.mxu0 0.0
    %222 = vmatpush1.xpose.msra.mxu0 0.0
    %223 = vmatprep.subr.mxu0 0.0
    %224 = vmatpush1.xpose.msra.mxu0 0.0
    %225 = vmatprep.subr.mxu0 0.0
    %226 = vmatpush1.xpose.msra.mxu0 0.0
    %227 = vmatprep.subr.mxu0 0.0
    %228 = vmatpush1.xpose.msra.mxu0 0.0
    %229 = vmatprep.subr.mxu0 0.0
    %230 = vmatpush1.xpose.msra.mxu0 0.0
    %231 = vmatprep.subr.mxu0 0.0
    %232 = vmatpush1.xpose.msra.mxu0 0.0
    %233 = vmatprep.subr.mxu0 0.0
    %234 = vmatpush1.xpose.msra.mxu0 0.0
    %235 = vmatprep.subr.mxu0 0.0
    %236 = vmatpush1.xpose.msra.mxu0 0.0
    %237 = vmatprep.subr.mxu0 0.0
    %238 = vmatpush1.xpose.msra.mxu0 0.0
    %239 = vmatprep.mubr.f32.mxu0 0.0
    %240 = vmatmul.mubr.f32.gmra.mrb[0].mxu0 %v170
    %v241 = vpop.f32.mrb[0].mxu0
    %v242 = vadd.f32 0.0, %v241
    %v243 = vpop.f32.mrb[0].mxu0
    %244 = vdwg.mxu0
    %v245 = vsel %vm73, %v169, 0
    %v248 = vsel %vm73, %v66, 0
    %250 = vmatprep.subr.mxu0 0.0
    %251 = vmatpush1.xpose.msra.mxu0 %v248
    %252 = vmatprep.subr.mxu0 0.0
    %253 = vmatpush1.xpose.msra.mxu0 0.0
    %254 = vmatprep.subr.mxu0 0.0
    %255 = vmatpush1.xpose.msra.mxu0 0.0
    %256 = vmatprep.subr.mxu0 0.0
    %257 = vmatpush1.xpose.msra.mxu0 0.0
    %258 = vmatprep.subr.mxu0 0.0
    %259 = vmatpush1.xpose.msra.mxu0 0.0
    %260 = vmatprep.subr.mxu0 0.0
    %261 = vmatpush1.xpose.msra.mxu0 0.0
    %262 = vmatprep.subr.mxu0 0.0
    %263 = vmatpush1.xpose.msra.mxu0 0.0
    %264 = vmatprep.subr.mxu0 0.0
    %265 = vmatpush1.xpose.msra.mxu0 0.0
    %266 = vmatprep.subr.mxu0 0.0
    %267 = vmatpush1.xpose.msra.mxu0 0.0
    %268 = vmatprep.subr.mxu0 0.0
    %269 = vmatpush1.xpose.msra.mxu0 0.0
    %270 = vmatprep.subr.mxu0 0.0
    %271 = vmatpush1.xpose.msra.mxu0 0.0
    %272 = vmatprep.subr.mxu0 0.0
    %273 = vmatpush1.xpose.msra.mxu0 0.0
    %274 = vmatprep.subr.mxu0 0.0
    %275 = vmatpush1.xpose.msra.mxu0 0.0
    %276 = vmatprep.subr.mxu0 0.0
    %277 = vmatpush1.xpose.msra.mxu0 0.0
    %278 = vmatprep.subr.mxu0 0.0
    %279 = vmatpush1.xpose.msra.mxu0 0.0
    %280 = vmatprep.subr.mxu0 0.0
    %281 = vmatpush1.xpose.msra.mxu0 0.0
    %282 = vmatprep.subr.mxu0 0.0
    %283 = vmatpush1.xpose.msra.mxu0 0.0
    %284 = vmatprep.subr.mxu0 0.0
    %285 = vmatpush1.xpose.msra.mxu0 0.0
    %286 = vmatprep.subr.mxu0 0.0
    %287 = vmatpush1.xpose.msra.mxu0 0.0
    %288 = vmatprep.subr.mxu0 0.0
    %289 = vmatpush1.xpose.msra.mxu0 0.0
    %290 = vmatprep.subr.mxu0 0.0
    %291 = vmatpush1.xpose.msra.mxu0 0.0
    %292 = vmatprep.subr.mxu0 0.0
    %293 = vmatpush1.xpose.msra.mxu0 0.0
    %294 = vmatprep.subr.mxu0 0.0
    %295 = vmatpush1.xpose.msra.mxu0 0.0
    %296 = vmatprep.subr.mxu0 0.0
    %297 = vmatpush1.xpose.msra.mxu0 0.0
    %298 = vmatprep.subr.mxu0 0.0
    %299 = vmatpush1.xpose.msra.mxu0 0.0
    %300 = vmatprep.subr.mxu0 0.0
    %301 = vmatpush1.xpose.msra.mxu0 0.0
    %302 = vmatprep.subr.mxu0 0.0
    %303 = vmatpush1.xpose.msra.mxu0 0.0
    %304 = vmatprep.subr.mxu0 0.0
    %305 = vmatpush1.xpose.msra.mxu0 0.0
    %306 = vmatprep.subr.mxu0 0.0
    %307 = vmatpush1.xpose.msra.mxu0 0.0
    %308 = vmatprep.subr.mxu0 0.0
    %309 = vmatpush1.xpose.msra.mxu0 0.0
    %310 = vmatprep.subr.mxu0 0.0
    %311 = vmatpush1.xpose.msra.mxu0 0.0
    %312 = vmatprep.subr.mxu0 0.0
    %313 = vmatpush1.xpose.msra.mxu0 0.0
    %314 = vmatprep.mubr.f32.mxu0 0.0
    %315 = vmatmul.mubr.f32.gmra.mrb[0].mxu0 %v245
    %v316 = vpop.f32.mrb[0].mxu0
    %v317 = vadd.f32 0.0, %v316
    %v318 = vpop.f32.mrb[0].mxu0
    %319 = vdwg.mxu0
    %vm320 = vcmask 57344
    %v321 = vsel %vm320, %v242, -inf
    %322 = vmax.xlane.f32.xlu0 %v321
    %v323 = vpop.xlane.xlu0 %322
    %v324 = vsel %vm320, %v317, -inf
    %325 = vmax.xlane.f32.xlu0 %v324
    %v326 = vpop.xlane.xlu0 %325
    %v327 = vsub.f32 %v242, %v323
    %v328 = vsub.f32 %v317, %v326
    %v329 = vmul.f32 %v327, 1.442695
    %v330 = vpow.pop %v329
    %v331 = vmul.f32 %v328, 1.442695
    %v332 = vpow.pop %v331
    %v333 = vsel %vm320, %v330, 0.0
    %334 = vadd.xlane.f32.xlu0 %v333
    %v335 = vpop.xlane.xlu0 %334
    %v336 = vsel %vm320, %v332, 0.0
    %337 = vadd.xlane.f32.xlu0 %v336
    %v338 = vpop.xlane.xlu0 %337
    %v339 = vrcp.pop %v335
    %v340 = vrcp.pop %v338
    %v341 = vmul.f32 %v330, %v339
    %v342 = vmul.f32 %v332, %v340
    %vm343 = vcmask 64512
    %v345 = vsel %vm343, %v341, 0
    %347 = vmatprep.subr.mxu0 0.0
    %348 = vmatpush1.msra.mxu0 %v65
    %349 = vmatprep.subr.mxu0 0.0
    %350 = vmatpush1.msra.mxu0 0.0
    %351 = vmatprep.subr.mxu0 0.0
    %352 = vmatpush1.msra.mxu0 0.0
    %353 = vmatprep.subr.mxu0 0.0
    %354 = vmatpush1.msra.mxu0 0.0
    %355 = vmatprep.subr.mxu0 0.0
    %356 = vmatpush1.msra.mxu0 0.0
    %357 = vmatprep.subr.mxu0 0.0
    %358 = vmatpush1.msra.mxu0 0.0
    %359 = vmatprep.subr.mxu0 0.0
    %360 = vmatpush1.msra.mxu0 0.0
    %361 = vmatprep.subr.mxu0 0.0
    %362 = vmatpush1.msra.mxu0 0.0
    %363 = vmatprep.subr.mxu0 0.0
    %364 = vmatpush1.msra.mxu0 0.0
    %365 = vmatprep.subr.mxu0 0.0
    %366 = vmatpush1.msra.mxu0 0.0
    %367 = vmatprep.subr.mxu0 0.0
    %368 = vmatpush1.msra.mxu0 0.0
    %369 = vmatprep.subr.mxu0 0.0
    %370 = vmatpush1.msra.mxu0 0.0
    %371 = vmatprep.subr.mxu0 0.0
    %372 = vmatpush1.msra.mxu0 0.0
    %373 = vmatprep.subr.mxu0 0.0
    %374 = vmatpush1.msra.mxu0 0.0
    %375 = vmatprep.subr.mxu0 0.0
    %376 = vmatpush1.msra.mxu0 0.0
    %377 = vmatprep.subr.mxu0 0.0
    %378 = vmatpush1.msra.mxu0 0.0
    %379 = vmatprep.subr.mxu0 0.0
    %380 = vmatpush1.msra.mxu0 0.0
    %381 = vmatprep.subr.mxu0 0.0
    %382 = vmatpush1.msra.mxu0 0.0
    %383 = vmatprep.subr.mxu0 0.0
    %384 = vmatpush1.msra.mxu0 0.0
    %385 = vmatprep.subr.mxu0 0.0
    %386 = vmatpush1.msra.mxu0 0.0
    %387 = vmatprep.subr.mxu0 0.0
    %388 = vmatpush1.msra.mxu0 0.0
    %389 = vmatprep.subr.mxu0 0.0
    %390 = vmatpush1.msra.mxu0 0.0
    %391 = vmatprep.subr.mxu0 0.0
    %392 = vmatpush1.msra.mxu0 0.0
    %393 = vmatprep.subr.mxu0 0.0
    %394 = vmatpush1.msra.mxu0 0.0
    %395 = vmatprep.subr.mxu0 0.0
    %396 = vmatpush1.msra.mxu0 0.0
    %397 = vmatprep.subr.mxu0 0.0
    %398 = vmatpush1.msra.mxu0 0.0
    %399 = vmatprep.subr.mxu0 0.0
    %400 = vmatpush1.msra.mxu0 0.0
    %401 = vmatprep.subr.mxu0 0.0
    %402 = vmatpush1.msra.mxu0 0.0
    %403 = vmatprep.subr.mxu0 0.0
    %404 = vmatpush1.msra.mxu0 0.0
    %405 = vmatprep.subr.mxu0 0.0
    %406 = vmatpush1.msra.mxu0 0.0
    %407 = vmatprep.subr.mxu0 0.0
    %408 = vmatpush1.msra.mxu0 0.0
    %409 = vmatprep.subr.mxu0 0.0
    %410 = vmatpush1.msra.mxu0 0.0
    %411 = vmatprep.mubr.f32.mxu0 0.0
    %412 = vmatmul.mubr.f32.gmra.mrb[0].mxu0 %v345
    %v413 = vpop.f32.mrb[0].mxu0
    %v414 = vadd.f32 0.0, %v413
    %v415 = vpop.f32.mrb[0].mxu0
    %416 = vdwg.mxu0
    %v418 = vsel %vm343, %v342, 0
    %420 = vmatprep.subr.mxu0 0.0
    %421 = vmatpush1.msra.mxu0 %v66
    %422 = vmatprep.subr.mxu0 0.0
    %423 = vmatpush1.msra.mxu0 0.0
    %424 = vmatprep.subr.mxu0 0.0
    %425 = vmatpush1.msra.mxu0 0.0
    %426 = vmatprep.subr.mxu0 0.0
    %427 = vmatpush1.msra.mxu0 0.0
    %428 = vmatprep.subr.mxu0 0.0
    %429 = vmatpush1.msra.mxu0 0.0
    %430 = vmatprep.subr.mxu0 0.0
    %431 = vmatpush1.msra.mxu0 0.0
    %432 = vmatprep.subr.mxu0 0.0
    %433 = vmatpush1.msra.mxu0 0.0
    %434 = vmatprep.subr.mxu0 0.0
    %435 = vmatpush1.msra.mxu0 0.0
    %436 = vmatprep.subr.mxu0 0.0
    %437 = vmatpush1.msra.mxu0 0.0
    %438 = vmatprep.subr.mxu0 0.0
    %439 = vmatpush1.msra.mxu0 0.0
    %440 = vmatprep.subr.mxu0 0.0
    %441 = vmatpush1.msra.mxu0 0.0
    %442 = vmatprep.subr.mxu0 0.0
    %443 = vmatpush1.msra.mxu0 0.0
    %444 = vmatprep.subr.mxu0 0.0
    %445 = vmatpush1.msra.mxu0 0.0
    %446 = vmatprep.subr.mxu0 0.0
    %447 = vmatpush1.msra.mxu0 0.0
    %448 = vmatprep.subr.mxu0 0.0
    %449 = vmatpush1.msra.mxu0 0.0
    %450 = vmatprep.subr.mxu0 0.0
    %451 = vmatpush1.msra.mxu0 0.0
    %452 = vmatprep.subr.mxu0 0.0
    %453 = vmatpush1.msra.mxu0 0.0
    %454 = vmatprep.subr.mxu0 0.0
    %455 = vmatpush1.msra.mxu0 0.0
    %456 = vmatprep.subr.mxu0 0.0
    %457 = vmatpush1.msra.mxu0 0.0
    %458 = vmatprep.subr.mxu0 0.0
    %459 = vmatpush1.msra.mxu0 0.0
    %460 = vmatprep.subr.mxu0 0.0
    %461 = vmatpush1.msra.mxu0 0.0
    %462 = vmatprep.subr.mxu0 0.0
    %463 = vmatpush1.msra.mxu0 0.0
    %464 = vmatprep.subr.mxu0 0.0
    %465 = vmatpush1.msra.mxu0 0.0
    %466 = vmatprep.subr.mxu0 0.0
    %467 = vmatpush1.msra.mxu0 0.0
    %468 = vmatprep.subr.mxu0 0.0
    %469 = vmatpush1.msra.mxu0 0.0
    %470 = vmatprep.subr.mxu0 0.0
    %471 = vmatpush1.msra.mxu0 0.0
    %472 = vmatprep.subr.mxu0 0.0
    %473 = vmatpush1.msra.mxu0 0.0
    %474 = vmatprep.subr.mxu0 0.0
    %475 = vmatpush1.msra.mxu0 0.0
    %476 = vmatprep.subr.mxu0 0.0
    %477 = vmatpush1.msra.mxu0 0.0
    %478 = vmatprep.subr.mxu0 0.0
    %479 = vmatpush1.msra.mxu0 0.0
    %480 = vmatprep.subr.mxu0 0.0
    %481 = vmatpush1.msra.mxu0 0.0
    %482 = vmatprep.subr.mxu0 0.0
    %483 = vmatpush1.msra.mxu0 0.0
    %484 = vmatprep.mubr.f32.mxu0 0.0
    %485 = vmatmul.mubr.f32.gmra.mrb[0].mxu0 %v418
    %v486 = vpop.f32.mrb[0].mxu0
    %v487 = vadd.f32 0.0, %v486
    %v488 = vpop.f32.mrb[0].mxu0
    %489 = vdwg.mxu0
    %v492 = vrot.slane %v487, 7
    %vm493 = vcmask 1041409
    %v494 = vsel %vm493, %v492, %v414
    %496 = vrot.lane.b32.xlu0 %v67, 32
    %v497 = vpop.permute.xlu0 %496
    %500 = vrot.lane.b32.xlu0 %v68, 64
    %v501 = vpop.permute.xlu0 %500
    %v503 = vsel %vm73, %v494, %v497
    %vm504 = vcmask 523264
    %v505 = vsel %vm504, %v503, %v501
    %v506 = vld [vmem:[#allocation7] sm:$0xff]
    %v507 = vld [vmem:[#allocation7 + $0x8] sm:$0xff]
    %v508 = vld [vmem:[#allocation7 + $0x10] sm:$0xff]
    %v509 = vld [vmem:[#allocation7 + $0x18] sm:$0xff]
    %v510 = vld [vmem:[#allocation7 + $0x20] sm:$0xff]
    %v511 = vld [vmem:[#allocation7 + $0x28] sm:$0xff]
    %v512 = vld [vmem:[#allocation7 + $0x30] sm:$0xff]
    %v513 = vld [vmem:[#allocation7 + $0x38] sm:$0xff]
    %v514 = vld [vmem:[#allocation7 + $0x40] sm:$0xff]
    %v515 = vld [vmem:[#allocation7 + $0x48] sm:$0xff]
    %v516 = vld [vmem:[#allocation7 + $0x50] sm:$0xff]
    %v517 = vld [vmem:[#allocation7 + $0x58] sm:$0xff]
    %v518 = vld [vmem:[%s5] sm:$0x1]
    %v520 = vlaneseq
    %v521 = vshrl.u32 %v520, 7
    %v522 = vsub.s32 0, %v521
    %v523 = vrot.slane %v518, %v522
    %vm525 = vcmask 785408
    %v527 = vsel %vm525, %v505, 0
    %529 = vmatprep.subr.mxu0 0.0
    %530 = vmatpush1.msra.mxu0 %v506
    %531 = vmatprep.subr.mxu0 0.0
    %532 = vmatpush1.msra.mxu0 %v507
    %533 = vmatprep.subr.mxu0 0.0
    %534 = vmatpush1.msra.mxu0 %v508
    %535 = vmatprep.subr.mxu0 0.0
    %536 = vmatpush1.msra.mxu0 %v509
    %537 = vmatprep.subr.mxu0 0.0
    %538 = vmatpush1.msra.mxu0 %v510
    %539 = vmatprep.subr.mxu0 0.0
    %540 = vmatpush1.msra.mxu0 %v511
    %541 = vmatprep.subr.mxu0 0.0
    %542 = vmatpush1.msra.mxu0 %v512
    %543 = vmatprep.subr.mxu0 0.0
    %544 = vmatpush1.msra.mxu0 %v513
    %545 = vmatprep.subr.mxu0 0.0
    %546 = vmatpush1.msra.mxu0 %v514
    %547 = vmatprep.subr.mxu0 0.0
    %548 = vmatpush1.msra.mxu0 %v515
    %549 = vmatprep.subr.mxu0 0.0
    %550 = vmatpush1.msra.mxu0 %v516
    %551 = vmatprep.subr.mxu0 0.0
    %552 = vmatpush1.msra.mxu0 %v517
    %553 = vmatprep.subr.mxu0 0.0
    %554 = vmatpush1.msra.mxu0 0.0
    %555 = vmatprep.subr.mxu0 0.0
    %556 = vmatpush1.msra.mxu0 0.0
    %557 = vmatprep.subr.mxu0 0.0
    %558 = vmatpush1.msra.mxu0 0.0
    %559 = vmatprep.subr.mxu0 0.0
    %560 = vmatpush1.msra.mxu0 0.0
    %561 = vmatprep.subr.mxu0 0.0
    %562 = vmatpush1.msra.mxu0 0.0
    %563 = vmatprep.subr.mxu0 0.0
    %564 = vmatpush1.msra.mxu0 0.0
    %565 = vmatprep.subr.mxu0 0.0
    %566 = vmatpush1.msra.mxu0 0.0
    %567 = vmatprep.subr.mxu0 0.0
    %568 = vmatpush1.msra.mxu0 0.0
    %569 = vmatprep.subr.mxu0 0.0
    %570 = vmatpush1.msra.mxu0 0.0
    %571 = vmatprep.subr.mxu0 0.0
    %572 = vmatpush1.msra.mxu0 0.0
    %573 = vmatprep.subr.mxu0 0.0
    %574 = vmatpush1.msra.mxu0 0.0
    %575 = vmatprep.subr.mxu0 0.0
    %576 = vmatpush1.msra.mxu0 0.0
    %577 = vmatprep.subr.mxu0 0.0
    %578 = vmatpush1.msra.mxu0 0.0
    %579 = vmatprep.subr.mxu0 0.0
    %580 = vmatpush1.msra.mxu0 0.0
    %581 = vmatprep.subr.mxu0 0.0
    %582 = vmatpush1.msra.mxu0 0.0
    %583 = vmatprep.subr.mxu0 0.0
    %584 = vmatpush1.msra.mxu0 0.0
    %585 = vmatprep.subr.mxu0 0.0
    %586 = vmatpush1.msra.mxu0 0.0
    %587 = vmatprep.subr.mxu0 0.0
    %588 = vmatpush1.msra.mxu0 0.0
    %589 = vmatprep.subr.mxu0 0.0
    %590 = vmatpush1.msra.mxu0 0.0
    %591 = vmatprep.subr.mxu0 0.0
    %592 = vmatpush1.msra.mxu0 0.0
    %593 = vmatprep.mubr.f32.mxu0 0.0
    %594 = vmatmul.mubr.f32.gmra.mrb[0].mxu0 %v527
    %v595 = vpop.f32.mrb[0].mxu0
    %v596 = vadd.f32 %v523, %v595
    %v597 = vpop.f32.mrb[0].mxu0
    %598 = vdwg.mxu0
    %599 = vst [vmem:[#allocation8] sm:$0x3] %v596
    // Predicated region
    $region38: #{tpu_custom_call.1} parent=1 // pred_check
      _
    $region39: #{tpu_custom_call.1} parent=1 // pred_check_branch
      %601 = sbr.rel (0) target = $region41
    $region40: #{tpu_custom_call.1} parent=1 // pred_region
      %s603 = ssub.s32 32, 32
      %604 = vsyncadd [#allocation4], %s603
      %s606 = sshll.u32 [#allocation8], 4
      %s607 = int_to_ptr.vmem [resolvable:$true] %s606
      %609 = dma.vmem_to_hbm [thread:$0]  %s607, 32, %s6, [#allocation4]
    $region41: #{tpu_custom_call.1} parent=1 // pred_fallthru
      _
    // Predicated region
    $region42: #{tpu_custom_call.1} parent=1 // pred_check
      _
    $region43: #{tpu_custom_call.1} parent=1 // pred_check_branch
      %611 = sbr.rel (0) target = $region45
    $region44: #{tpu_custom_call.1} parent=1 // pred_region
      %612 = dma.done [#allocation4], 32
    $region45: #{tpu_custom_call.1} parent=1 // pred_fallthru
      _
    %613 = vsyncpa [#allocation3], 1
    %614 = vsyncpa [#allocation6], 1
    %615 = vsyncpa [#allocation4], 1

</llo_original>
